<compile_context>
chip_gen: v7x
topology: tpu7x:2x2x1
jax: 0.10.0
libtpu: 0.0.40
codegen_flags: <defaults>
</compile_context>

<pallas_src>
import functools

import jax
import jax.numpy as jnp
from jax.experimental import pallas as pl
from jax.experimental.pallas import tpu as pltpu


def attention_kernel(x_ref, w_ref, v_ref, o_ref, *, n_batch, seq_len):
    # x_ref: [N*W, H] (batch-flattened), w_ref: [H, H], v_ref: [1, H], o_ref: [N, H]
    x = x_ref[...]
    w = w_ref[...]
    v = v_ref[...]

    # One fused MXU matmul for all batches: tanh(x @ w).
    wplus = jnp.tanh(jnp.dot(x, w, preferred_element_type=jnp.float32))   # [N*W, H]

    # scores = wplus @ v as a lane-reduction (no 1-lane-wide matmul).
    scores = jnp.sum(wplus * v, axis=-1, keepdims=True)                   # [N*W, 1]

    # Per-batch softmax over W (sublane axis) + weighted average of x.
    rows = []
    for n in range(n_batch):                      # static, fully unrolled
        lo, hi = n * seq_len, (n + 1) * seq_len
        s = scores[lo:hi]                                                 # [W, 1]
        s = s - jnp.max(s, axis=0, keepdims=True)
        e = jnp.exp(s)
        att = e / jnp.sum(e, axis=0, keepdims=True)                       # [W, 1]
        rows.append(jnp.sum(att * x[lo:hi], axis=0, keepdims=True))       # [1, H]

    o_ref[...] = jnp.concatenate(rows, axis=0).astype(o_ref.dtype)        # [N, H]


def attention_forward(x, w, v):
    """x: [N, W, H]; w: [H, H]; v: [H]  ->  [N, 1, H] (matches torch.bmm output)."""
    N, W, H = x.shape
    x2 = x.reshape(N * W, H)      # free XLA reshape; kernel stays 2-D / lane-dense
    v2 = v.reshape(1, H)

    kernel = functools.partial(attention_kernel, n_batch=N, seq_len=W)

    out = pl.pallas_call(
        kernel,
        out_shape=jax.ShapeDtypeStruct((N, H), jnp.float32),
        grid_spec=pltpu.PrefetchScalarGridSpec(
            num_scalar_prefetch=0,
            grid=(1,),                                    # single step: no pipeline overhead
            in_specs=[
                pl.BlockSpec((N * W, H), lambda i: (0, 0)),   # x (flattened, full block)
                pl.BlockSpec((H, H), lambda i: (0, 0)),       # w
                pl.BlockSpec((1, H), lambda i: (0, 0)),       # v
            ],
            out_specs=pl.BlockSpec((N, H), lambda i: (0, 0)),
        ),
        compiler_params=pltpu.CompilerParams(
            dimension_semantics=("arbitrary",),
        ),
    )(x2, w, v2)

    return out[:, None, :]   # [N, 1, H]


def attention_ref(x, w, v):
    """Pure-JAX reference mirroring the PyTorch module."""
    wplus = jnp.tanh(jnp.einsum("nwh,hk->nwk", x, w))
    att = jax.nn.softmax(jnp.einsum("nwh,h->nw", wplus, v), axis=1)
    return jnp.einsum("nw,nwh->nh", att, x)[:, None, :]


if __name__ == "__main__":
    batch, seq, dim = 4, 16, 128      # small shapes; dim=128 keeps lanes dense

    key = jax.random.PRNGKey(0)
    kx, kw, kv = jax.random.split(key, 3)

    x = jax.random.normal(kx, (batch, seq, dim), dtype=jnp.float32)

    # Mimic reset_parameters(): U(-1/sqrt(dim), 1/sqrt(dim)).
    stdv = 1.0 / (dim ** 0.5)
    w = jax.random.uniform(kw, (dim, dim), jnp.float32, -stdv, stdv)
    v = jax.random.uniform(kv, (dim,), jnp.float32, -stdv, stdv)

    out = attention_forward(x, w, v)
    out = jax.block_until_ready(out)

    ref = attention_ref(x, w, v)
    assert out.shape == (batch, 1, dim)
    # Small headroom for MXU f32 summation-order differences vs XLA.
    assert jnp.allclose(out, ref, atol=2e-4, rtol=2e-4), "mismatch vs reference"

    print("KERNEL_OK")
</pallas_src>

<mosaic_0001>
module attributes {stable_mosaic.version = 11 : i64} {
  func.func @attention_kernel(%arg0: i32, %arg1: memref<64x128xf32, #tpu.memory_space<vmem>>, %arg2: memref<128x128xf32, #tpu.memory_space<vmem>>, %arg3: memref<1x128xf32, #tpu.memory_space<vmem>>, %arg4: memref<4x128xf32, #tpu.memory_space<vmem>>) attributes {dimension_semantics = [#tpu.dimension_semantics<arbitrary>], iteration_bounds = array<i64: 1>, scalar_prefetch = 0 : i64, scratch_operands = 0 : i64, tpu.core_type = #tpu.core_type<tc>, window_params = [{pipeline_mode = #tpu.pipeline_mode<synchronous>, transform_indices = @transform_0, window_bounds = array<i64: 64, 128>}, {pipeline_mode = #tpu.pipeline_mode<synchronous>, transform_indices = @transform_1, window_bounds = array<i64: 128, 128>}, {pipeline_mode = #tpu.pipeline_mode<synchronous>, transform_indices = @transform_2, window_bounds = array<i64: 1, 128>}, {pipeline_mode = #tpu.pipeline_mode<synchronous>, transform_indices = @transform_3, window_bounds = array<i64: 4, 128>}]} {
    %c0 = arith.constant 0 : index
    %c0_0 = arith.constant 0 : index
    %0 = vector.load %arg1[%c0, %c0_0] : memref<64x128xf32, #tpu.memory_space<vmem>>, vector<64x128xf32>
    %c0_1 = arith.constant 0 : index
    %c0_2 = arith.constant 0 : index
    %1 = vector.load %arg2[%c0_1, %c0_2] : memref<128x128xf32, #tpu.memory_space<vmem>>, vector<128x128xf32>
    %c0_3 = arith.constant 0 : index
    %c0_4 = arith.constant 0 : index
    %2 = vector.load %arg3[%c0_3, %c0_4] : memref<1x128xf32, #tpu.memory_space<vmem>>, vector<1x128xf32>
    %cst = arith.constant dense<0.000000e+00> : vector<64x128xf32>
    %3 = tpu.matmul %0, %1, %cst {dimension_numbers = #tpu.dot_dimension_numbers<[1], [0], [0], [1], [0, 0, 1, 1], [], []>} : vector<64x128xf32>, vector<128x128xf32>, vector<64x128xf32> -> vector<64x128xf32>
    %4 = math.tanh %3 : vector<64x128xf32>
    %5 = vector.broadcast %2 : vector<1x128xf32> to vector<64x128xf32>
    %6 = arith.mulf %4, %5 : vector<64x128xf32>
    %cst_5 = arith.constant dense<0.000000e+00> : vector<64xf32>
    %7 = vector.multi_reduction <add>, %6, %cst_5 [1] : vector<64x128xf32> to vector<64xf32>
    %8 = vector.shape_cast %7 : vector<64xf32> to vector<64x1xf32>
    %9 = vector.extract_strided_slice %8 {offsets = [0, 0], sizes = [16, 1], strides = [1, 1]} : vector<64x1xf32> to vector<16x1xf32>
    %cst_6 = arith.constant dense<0xFF800000> : vector<1xf32>
    %10 = vector.multi_reduction <maximumf>, %9, %cst_6 [0] : vector<16x1xf32> to vector<1xf32>
    %11 = vector.shape_cast %10 : vector<1xf32> to vector<1x1xf32>
    %12 = vector.broadcast %11 : vector<1x1xf32> to vector<16x1xf32>
    %13 = arith.subf %9, %12 : vector<16x1xf32>
    %14 = math.exp %13 : vector<16x1xf32>
    %cst_7 = arith.constant dense<0.000000e+00> : vector<1xf32>
    %15 = vector.multi_reduction <add>, %14, %cst_7 [0] : vector<16x1xf32> to vector<1xf32>
    %16 = vector.shape_cast %15 : vector<1xf32> to vector<1x1xf32>
    %17 = vector.broadcast %16 : vector<1x1xf32> to vector<16x1xf32>
    %18 = arith.divf %14, %17 : vector<16x1xf32>
    %19 = vector.extract_strided_slice %0 {offsets = [0, 0], sizes = [16, 128], strides = [1, 1]} : vector<64x128xf32> to vector<16x128xf32>
    %20 = vector.broadcast %18 : vector<16x1xf32> to vector<16x128xf32>
    %21 = arith.mulf %20, %19 : vector<16x128xf32>
    %cst_8 = arith.constant dense<0.000000e+00> : vector<128xf32>
    %22 = vector.multi_reduction <add>, %21, %cst_8 [0] : vector<16x128xf32> to vector<128xf32>
    %23 = vector.shape_cast %22 : vector<128xf32> to vector<1x128xf32>
    %24 = vector.extract_strided_slice %8 {offsets = [16, 0], sizes = [16, 1], strides = [1, 1]} : vector<64x1xf32> to vector<16x1xf32>
    %cst_9 = arith.constant dense<0xFF800000> : vector<1xf32>
    %25 = vector.multi_reduction <maximumf>, %24, %cst_9 [0] : vector<16x1xf32> to vector<1xf32>
    %26 = vector.shape_cast %25 : vector<1xf32> to vector<1x1xf32>
    %27 = vector.broadcast %26 : vector<1x1xf32> to vector<16x1xf32>
    %28 = arith.subf %24, %27 : vector<16x1xf32>
    %29 = math.exp %28 : vector<16x1xf32>
    %cst_10 = arith.constant dense<0.000000e+00> : vector<1xf32>
    %30 = vector.multi_reduction <add>, %29, %cst_10 [0] : vector<16x1xf32> to vector<1xf32>
    %31 = vector.shape_cast %30 : vector<1xf32> to vector<1x1xf32>
    %32 = vector.broadcast %31 : vector<1x1xf32> to vector<16x1xf32>
    %33 = arith.divf %29, %32 : vector<16x1xf32>
    %34 = vector.extract_strided_slice %0 {offsets = [16, 0], sizes = [16, 128], strides = [1, 1]} : vector<64x128xf32> to vector<16x128xf32>
    %35 = vector.broadcast %33 : vector<16x1xf32> to vector<16x128xf32>
    %36 = arith.mulf %35, %34 : vector<16x128xf32>
    %cst_11 = arith.constant dense<0.000000e+00> : vector<128xf32>
    %37 = vector.multi_reduction <add>, %36, %cst_11 [0] : vector<16x128xf32> to vector<128xf32>
    %38 = vector.shape_cast %37 : vector<128xf32> to vector<1x128xf32>
    %39 = vector.extract_strided_slice %8 {offsets = [32, 0], sizes = [16, 1], strides = [1, 1]} : vector<64x1xf32> to vector<16x1xf32>
    %cst_12 = arith.constant dense<0xFF800000> : vector<1xf32>
    %40 = vector.multi_reduction <maximumf>, %39, %cst_12 [0] : vector<16x1xf32> to vector<1xf32>
    %41 = vector.shape_cast %40 : vector<1xf32> to vector<1x1xf32>
    %42 = vector.broadcast %41 : vector<1x1xf32> to vector<16x1xf32>
    %43 = arith.subf %39, %42 : vector<16x1xf32>
    %44 = math.exp %43 : vector<16x1xf32>
    %cst_13 = arith.constant dense<0.000000e+00> : vector<1xf32>
    %45 = vector.multi_reduction <add>, %44, %cst_13 [0] : vector<16x1xf32> to vector<1xf32>
    %46 = vector.shape_cast %45 : vector<1xf32> to vector<1x1xf32>
    %47 = vector.broadcast %46 : vector<1x1xf32> to vector<16x1xf32>
    %48 = arith.divf %44, %47 : vector<16x1xf32>
    %49 = vector.extract_strided_slice %0 {offsets = [32, 0], sizes = [16, 128], strides = [1, 1]} : vector<64x128xf32> to vector<16x128xf32>
    %50 = vector.broadcast %48 : vector<16x1xf32> to vector<16x128xf32>
    %51 = arith.mulf %50, %49 : vector<16x128xf32>
    %cst_14 = arith.constant dense<0.000000e+00> : vector<128xf32>
    %52 = vector.multi_reduction <add>, %51, %cst_14 [0] : vector<16x128xf32> to vector<128xf32>
    %53 = vector.shape_cast %52 : vector<128xf32> to vector<1x128xf32>
    %54 = vector.extract_strided_slice %8 {offsets = [48, 0], sizes = [16, 1], strides = [1, 1]} : vector<64x1xf32> to vector<16x1xf32>
    %cst_15 = arith.constant dense<0xFF800000> : vector<1xf32>
    %55 = vector.multi_reduction <maximumf>, %54, %cst_15 [0] : vector<16x1xf32> to vector<1xf32>
    %56 = vector.shape_cast %55 : vector<1xf32> to vector<1x1xf32>
    %57 = vector.broadcast %56 : vector<1x1xf32> to vector<16x1xf32>
    %58 = arith.subf %54, %57 : vector<16x1xf32>
    %59 = math.exp %58 : vector<16x1xf32>
    %cst_16 = arith.constant dense<0.000000e+00> : vector<1xf32>
    %60 = vector.multi_reduction <add>, %59, %cst_16 [0] : vector<16x1xf32> to vector<1xf32>
    %61 = vector.shape_cast %60 : vector<1xf32> to vector<1x1xf32>
    %62 = vector.broadcast %61 : vector<1x1xf32> to vector<16x1xf32>
    %63 = arith.divf %59, %62 : vector<16x1xf32>
    %64 = vector.extract_strided_slice %0 {offsets = [48, 0], sizes = [16, 128], strides = [1, 1]} : vector<64x128xf32> to vector<16x128xf32>
    %65 = vector.broadcast %63 : vector<16x1xf32> to vector<16x128xf32>
    %66 = arith.mulf %65, %64 : vector<16x128xf32>
    %cst_17 = arith.constant dense<0.000000e+00> : vector<128xf32>
    %67 = vector.multi_reduction <add>, %66, %cst_17 [0] : vector<16x128xf32> to vector<128xf32>
    %68 = vector.shape_cast %67 : vector<128xf32> to vector<1x128xf32>
    %69 = tpu.concatenate %23, %38, %53, %68 in 0 : vector<1x128xf32>, vector<1x128xf32>, vector<1x128xf32>, vector<1x128xf32> -> vector<4x128xf32>
    %c0_18 = arith.constant 0 : index
    %c0_19 = arith.constant 0 : index
    %70 = vector.load %arg4[%c0_18, %c0_19] : memref<4x128xf32, #tpu.memory_space<vmem>>, vector<4x128xf32>
    tpu.vector_store %arg4[%c0_18, %c0_19], %69 {strides = array<i32>} : memref<4x128xf32, #tpu.memory_space<vmem>>, vector<4x128xf32>,
    return
  }
  func.func @transform_0(%arg0: i32) -> (i32, i32) {
    %c0_i32 = arith.constant 0 : i32
    %c0_i32_0 = arith.constant 0 : i32
    %c0_i32_1 = arith.constant 0 : i32
    return %c0_i32, %c0_i32_0 : i32, i32
  }
  func.func @transform_1(%arg0: i32) -> (i32, i32) {
    %c0_i32 = arith.constant 0 : i32
    %c0_i32_0 = arith.constant 0 : i32
    %c0_i32_1 = arith.constant 0 : i32
    return %c0_i32, %c0_i32_0 : i32, i32
  }
  func.func @transform_2(%arg0: i32) -> (i32, i32) {
    %c0_i32 = arith.constant 0 : i32
    %c0_i32_0 = arith.constant 0 : i32
    %c0_i32_1 = arith.constant 0 : i32
    return %c0_i32, %c0_i32_0 : i32, i32
  }
  func.func @transform_3(%arg0: i32) -> (i32, i32) {
    %c0_i32 = arith.constant 0 : i32
    %c0_i32_0 = arith.constant 0 : i32
    %c0_i32_1 = arith.constant 0 : i32
    return %c0_i32, %c0_i32_0 : i32, i32
  }
}

</mosaic_0001>

<llo_original>
// kernel: tpu_custom_call.1
$region0: #{tpu_custom_call.1}
  #allocation0 [shape = 'u32[]', space=smem, size = 0x4, offset = 0x4, fixed_abs, tag = 'smem constant byte address 0x4 - core index']
  #allocation1 [shape = 'u32[144,128]{1,0:T(1,128)}', space=vmem, size = 0x12000, scoped, tag = 'internal scratch']
  %s0 = inlined_call_operand.hbm [shape: f32[64,128], index: 0, kind: input, shape index: {}]
  %s1 = inlined_call_operand.hbm [shape: f32[128,128], index: 1, kind: input, shape index: {}]
  %s2 = inlined_call_operand.vmem [shape: f32[1,128], index: 2, kind: input, shape index: {}]
  %s3 = inlined_call_operand.hbm [shape: f32[4,128], index: 3, kind: output, shape index: {}]
  %s4 = sld [smem:[#allocation0]]
  $region30: #{tpu_custom_call.1} parent=0
    _
  %s6 = ssub.s32 1, %s4
  %s7 = scalar_select 0, %s6, %s4
  $region1: #{tpu_custom_call.1} parent=0
    #allocation2 [shape = 'u8[32768]{0}', space=vmem, size = 0x8000, scoped, tag = 'input window, operand 0, single buffered']
    #allocation3 [shape = 's32[1]{0}', space=sflag, size = 0x4, scoped, tag = 'scoped memory for tpu_custom_call.1']
    #allocation4 [shape = 's32[1]{0}', space=sflag, size = 0x4, scoped, tag = 'scoped memory for tpu_custom_call.1']
    #allocation5 [shape = 'u8[65536]{0}', space=vmem, size = 0x10000, scoped, tag = 'input window, operand 1, single buffered']
    #allocation6 [shape = 's32[1]{0}', space=sflag, size = 0x4, scoped, tag = 'scoped memory for tpu_custom_call.1']
    #allocation7 [shape = 'u8[2048]{0}', space=vmem, size = 0x800, scoped, tag = 'output window, operand 0, single buffered']
    %8 = vsyncpa [#allocation3], 0
    %9 = vsyncpa [#allocation6], 0
    %10 = vsyncpa [#allocation4], 0
    // Predicated region
    $region2: #{tpu_custom_call.1} parent=1 // pred_check
      _
    $region3: #{tpu_custom_call.1} parent=1 // pred_check_branch
      %12 = sbr.rel (0) target = $region5
    $region4: #{tpu_custom_call.1} parent=1 // pred_region
      %s14 = ssub.s32 1024, 1024
      %15 = vsyncadd [#allocation3], %s14
      %s16 = sshll.u32 [#allocation2], 4
      %s17 = int_to_ptr.vmem [resolvable:$true] %s16
      %22 = dma.hbm_to_vmem [thread:$0]  %s0, 1024, %s17, [#allocation3], 128, 128, 8
    $region5: #{tpu_custom_call.1} parent=1 // pred_fallthru
      _
    // Predicated region
    $region6: #{tpu_custom_call.1} parent=1 // pred_check
      _
    $region7: #{tpu_custom_call.1} parent=1 // pred_check_branch
      %24 = sbr.rel (0) target = $region9
    $region8: #{tpu_custom_call.1} parent=1 // pred_region
      %s26 = ssub.s32 2048, 2048
      %27 = vsyncadd [#allocation6], %s26
      %s28 = sshll.u32 [#allocation5], 4
      %s29 = int_to_ptr.vmem [resolvable:$true] %s28
      %34 = dma.hbm_to_vmem [thread:$0]  %s1, 2048, %s29, [#allocation6], 128, 128, 8
    $region9: #{tpu_custom_call.1} parent=1 // pred_fallthru
      _
    // Predicated region
    $region10: #{tpu_custom_call.1} parent=1 // pred_check
      _
    $region11: #{tpu_custom_call.1} parent=1 // pred_check_branch
      %36 = sbr.rel (0) target = $region13
    $region12: #{tpu_custom_call.1} parent=1 // pred_region
      _
    $region13: #{tpu_custom_call.1} parent=1 // pred_fallthru
      _
    // Predicated region
    $region14: #{tpu_custom_call.1} parent=1 // pred_check
      _
    $region15: #{tpu_custom_call.1} parent=1 // pred_check_branch
      %38 = sbr.rel (0) target = $region17
    $region16: #{tpu_custom_call.1} parent=1 // pred_region
      %39 = dma.done [#allocation3], 1024
    $region17: #{tpu_custom_call.1} parent=1 // pred_fallthru
      _
    // Predicated region
    $region18: #{tpu_custom_call.1} parent=1 // pred_check
      _
    $region19: #{tpu_custom_call.1} parent=1 // pred_check_branch
      %41 = sbr.rel (0) target = $region21
    $region20: #{tpu_custom_call.1} parent=1 // pred_region
      %42 = dma.done [#allocation6], 2048
    $region21: #{tpu_custom_call.1} parent=1 // pred_fallthru
      _
    %v43 = vld [vmem:[#allocation2] sm:$0xff]
    %v44 = vld [vmem:[#allocation2 + $0x8] sm:$0xff]
    %v45 = vld [vmem:[#allocation2 + $0x10] sm:$0xff]
    %v46 = vld [vmem:[#allocation2 + $0x18] sm:$0xff]
    %v47 = vld [vmem:[#allocation2 + $0x20] sm:$0xff]
    %v48 = vld [vmem:[#allocation2 + $0x28] sm:$0xff]
    %v49 = vld [vmem:[#allocation2 + $0x30] sm:$0xff]
    %v50 = vld [vmem:[#allocation2 + $0x38] sm:$0xff]
    %v51 = vld [vmem:[#allocation5] sm:$0xff]
    %v52 = vld [vmem:[#allocation5 + $0x8] sm:$0xff]
    %v53 = vld [vmem:[#allocation5 + $0x10] sm:$0xff]
    %v54 = vld [vmem:[#allocation5 + $0x18] sm:$0xff]
    %v55 = vld [vmem:[#allocation5 + $0x20] sm:$0xff]
    %v56 = vld [vmem:[#allocation5 + $0x28] sm:$0xff]
    %v57 = vld [vmem:[#allocation5 + $0x30] sm:$0xff]
    %v58 = vld [vmem:[#allocation5 + $0x38] sm:$0xff]
    %v59 = vld [vmem:[#allocation5 + $0x40] sm:$0xff]
    %v60 = vld [vmem:[#allocation5 + $0x48] sm:$0xff]
    %v61 = vld [vmem:[#allocation5 + $0x50] sm:$0xff]
    %v62 = vld [vmem:[#allocation5 + $0x58] sm:$0xff]
    %v63 = vld [vmem:[#allocation5 + $0x60] sm:$0xff]
    %v64 = vld [vmem:[#allocation5 + $0x68] sm:$0xff]
    %v65 = vld [vmem:[#allocation5 + $0x70] sm:$0xff]
    %v66 = vld [vmem:[#allocation5 + $0x78] sm:$0xff]
    %v67 = vld [vmem:[%s2] sm:$0x1]
    %68 = vmatprep.subr.mxu0 0.0
    %69 = vmatpush1.msra.mxu0 %v51
    %70 = vmatprep.subr.mxu0 0.0
    %71 = vmatpush1.msra.mxu0 %v52
    %72 = vmatprep.subr.mxu0 0.0
    %73 = vmatpush1.msra.mxu0 %v53
    %74 = vmatprep.subr.mxu0 0.0
    %75 = vmatpush1.msra.mxu0 %v54
    %76 = vmatprep.subr.mxu0 0.0
    %77 = vmatpush1.msra.mxu0 %v55
    %78 = vmatprep.subr.mxu0 0.0
    %79 = vmatpush1.msra.mxu0 %v56
    %80 = vmatprep.subr.mxu0 0.0
    %81 = vmatpush1.msra.mxu0 %v57
    %82 = vmatprep.subr.mxu0 0.0
    %83 = vmatpush1.msra.mxu0 %v58
    %84 = vmatprep.subr.mxu0 0.0
    %85 = vmatpush1.msra.mxu0 %v59
    %86 = vmatprep.subr.mxu0 0.0
    %87 = vmatpush1.msra.mxu0 %v60
    %88 = vmatprep.subr.mxu0 0.0
    %89 = vmatpush1.msra.mxu0 %v61
    %90 = vmatprep.subr.mxu0 0.0
    %91 = vmatpush1.msra.mxu0 %v62
    %92 = vmatprep.subr.mxu0 0.0
    %93 = vmatpush1.msra.mxu0 %v63
    %94 = vmatprep.subr.mxu0 0.0
    %95 = vmatpush1.msra.mxu0 %v64
    %96 = vmatprep.subr.mxu0 0.0
    %97 = vmatpush1.msra.mxu0 %v65
    %98 = vmatprep.subr.mxu0 0.0
    %99 = vmatpush1.msra.mxu0 %v66
    %100 = vmatprep.subr.mxu0 0.0
    %101 = vmatpush1.msra.mxu0 0.0
    %102 = vmatprep.subr.mxu0 0.0
    %103 = vmatpush1.msra.mxu0 0.0
    %104 = vmatprep.subr.mxu0 0.0
    %105 = vmatpush1.msra.mxu0 0.0
    %106 = vmatprep.subr.mxu0 0.0
    %107 = vmatpush1.msra.mxu0 0.0
    %108 = vmatprep.subr.mxu0 0.0
    %109 = vmatpush1.msra.mxu0 0.0
    %110 = vmatprep.subr.mxu0 0.0
    %111 = vmatpush1.msra.mxu0 0.0
    %112 = vmatprep.subr.mxu0 0.0
    %113 = vmatpush1.msra.mxu0 0.0
    %114 = vmatprep.subr.mxu0 0.0
    %115 = vmatpush1.msra.mxu0 0.0
    %116 = vmatprep.subr.mxu0 0.0
    %117 = vmatpush1.msra.mxu0 0.0
    %118 = vmatprep.subr.mxu0 0.0
    %119 = vmatpush1.msra.mxu0 0.0
    %120 = vmatprep.subr.mxu0 0.0
    %121 = vmatpush1.msra.mxu0 0.0
    %122 = vmatprep.subr.mxu0 0.0
    %123 = vmatpush1.msra.mxu0 0.0
    %124 = vmatprep.subr.mxu0 0.0
    %125 = vmatpush1.msra.mxu0 0.0
    %126 = vmatprep.subr.mxu0 0.0
    %127 = vmatpush1.msra.mxu0 0.0
    %128 = vmatprep.subr.mxu0 0.0
    %129 = vmatpush1.msra.mxu0 0.0
    %130 = vmatprep.subr.mxu0 0.0
    %131 = vmatpush1.msra.mxu0 0.0
    %132 = vmatprep.mubr.f32.mxu0 0.0
    %133 = vmatmul.mubr.f32.gmra.mrb[0].mxu0 %v43
    %v134 = vpop.f32.mrb[0].mxu0
    %v135 = vadd.f32 0.0, %v134
    %v136 = vpop.f32.mrb[0].mxu0
    %137 = vmatprep.mubr.f32.mxu0 0.0
    %138 = vmatmul.mubr.f32.gmra.mrb[0].mxu0 %v44
    %v139 = vpop.f32.mrb[0].mxu0
    %v140 = vadd.f32 0.0, %v139
    %v141 = vpop.f32.mrb[0].mxu0
    %142 = vmatprep.mubr.f32.mxu0 0.0
    %143 = vmatmul.mubr.f32.gmra.mrb[0].mxu0 %v45
    %v144 = vpop.f32.mrb[0].mxu0
    %v145 = vadd.f32 0.0, %v144
    %v146 = vpop.f32.mrb[0].mxu0
    %147 = vmatprep.mubr.f32.mxu0 0.0
    %148 = vmatmul.mubr.f32.gmra.mrb[0].mxu0 %v46
    %v149 = vpop.f32.mrb[0].mxu0
    %v150 = vadd.f32 0.0, %v149
    %v151 = vpop.f32.mrb[0].mxu0
    %152 = vmatprep.mubr.f32.mxu0 0.0
    %153 = vmatmul.mubr.f32.gmra.mrb[0].mxu0 %v47
    %v154 = vpop.f32.mrb[0].mxu0
    %v155 = vadd.f32 0.0, %v154
    %v156 = vpop.f32.mrb[0].mxu0
    %157 = vmatprep.mubr.f32.mxu0 0.0
    %158 = vmatmul.mubr.f32.gmra.mrb[0].mxu0 %v48
    %v159 = vpop.f32.mrb[0].mxu0
    %v160 = vadd.f32 0.0, %v159
    %v161 = vpop.f32.mrb[0].mxu0
    %162 = vmatprep.mubr.f32.mxu0 0.0
    %163 = vmatmul.mubr.f32.gmra.mrb[0].mxu0 %v49
    %v164 = vpop.f32.mrb[0].mxu0
    %v165 = vadd.f32 0.0, %v164
    %v166 = vpop.f32.mrb[0].mxu0
    %167 = vmatprep.mubr.f32.mxu0 0.0
    %168 = vmatmul.mubr.f32.gmra.mrb[0].mxu0 %v50
    %v169 = vpop.f32.mrb[0].mxu0
    %v170 = vadd.f32 0.0, %v169
    %v171 = vpop.f32.mrb[0].mxu0
    %172 = vdwg.mxu0
    %v173 = vtanh.pop %v135
    %v174 = vtanh.pop %v140
    %v175 = vtanh.pop %v145
    %v176 = vtanh.pop %v150
    %v177 = vtanh.pop %v155
    %v178 = vtanh.pop %v160
    %v179 = vtanh.pop %v165
    %v180 = vtanh.pop %v170
    %v182 = vlaneseq
    %v183 = vshrl.u32 %v182, 7
    %v184 = vsub.s32 0, %v183
    %v185 = vrot.slane %v67, %v184
    %v187 = vmul.f32 %v173, %v185
    %v188 = vmul.f32 %v174, %v185
    %v189 = vmul.f32 %v175, %v185
    %v190 = vmul.f32 %v176, %v185
    %v191 = vmul.f32 %v177, %v185
    %v192 = vmul.f32 %v178, %v185
    %v193 = vmul.f32 %v179, %v185
    %v194 = vmul.f32 %v180, %v185
    %195 = vadd.xlane.f32.xlu0 %v187
    %v196 = vpop.xlane.xlu0 %195
    %197 = vadd.xlane.f32.xlu0 %v188
    %v198 = vpop.xlane.xlu0 %197
    %199 = vadd.xlane.f32.xlu0 %v189
    %v200 = vpop.xlane.xlu0 %199
    %201 = vadd.xlane.f32.xlu0 %v190
    %v202 = vpop.xlane.xlu0 %201
    %203 = vadd.xlane.f32.xlu0 %v191
    %v204 = vpop.xlane.xlu0 %203
    %205 = vadd.xlane.f32.xlu0 %v192
    %v206 = vpop.xlane.xlu0 %205
    %207 = vadd.xlane.f32.xlu0 %v193
    %v208 = vpop.xlane.xlu0 %207
    %209 = vadd.xlane.f32.xlu0 %v194
    %v210 = vpop.xlane.xlu0 %209
    %v211 = vmax.f32 %v196, %v198
    %v212 = vrot.slane %v211, 4
    %v213 = vmax.f32 %v211, %v212
    %v214 = vrot.slane %v213, 2
    %v215 = vmax.f32 %v213, %v214
    %v216 = vrot.slane %v215, 1
    %v217 = vmax.f32 %v215, %v216
    %v218 = vsub.f32 %v196, %v217
    %v219 = vsub.f32 %v198, %v217
    %v220 = vmul.f32 %v218, 1.442695
    %v221 = vpow.pop %v220
    %v222 = vmul.f32 %v219, 1.442695
    %v223 = vpow.pop %v222
    %v224 = vadd.f32 %v221, %v223
    %v225 = vrot.slane %v224, 4
    %v226 = vadd.f32 %v224, %v225
    %v227 = vrot.slane %v226, 2
    %v228 = vadd.f32 %v226, %v227
    %v229 = vrot.slane %v228, 1
    %v230 = vadd.f32 %v228, %v229
    %v231 = vrcp.pop %v230
    %v232 = vmul.f32 %v221, %v231
    %v233 = vmul.f32 %v223, %v231
    %v234 = vmul.f32 %v232, %v43
    %v235 = vmul.f32 %v233, %v44
    %v236 = vadd.f32 %v234, %v235
    %v237 = vrot.slane %v236, 4
    %v238 = vadd.f32 %v236, %v237
    %v239 = vrot.slane %v238, 2
    %v240 = vadd.f32 %v238, %v239
    %v241 = vrot.slane %v240, 1
    %v242 = vadd.f32 %v240, %v241
    %v243 = vmax.f32 %v200, %v202
    %v244 = vrot.slane %v243, 4
    %v245 = vmax.f32 %v243, %v244
    %v246 = vrot.slane %v245, 2
    %v247 = vmax.f32 %v245, %v246
    %v248 = vrot.slane %v247, 1
    %v249 = vmax.f32 %v247, %v248
    %v250 = vsub.f32 %v200, %v249
    %v251 = vsub.f32 %v202, %v249
    %v252 = vmul.f32 %v250, 1.442695
    %v253 = vpow.pop %v252
    %v254 = vmul.f32 %v251, 1.442695
    %v255 = vpow.pop %v254
    %v256 = vadd.f32 %v253, %v255
    %v257 = vrot.slane %v256, 4
    %v258 = vadd.f32 %v256, %v257
    %v259 = vrot.slane %v258, 2
    %v260 = vadd.f32 %v258, %v259
    %v261 = vrot.slane %v260, 1
    %v262 = vadd.f32 %v260, %v261
    %v263 = vrcp.pop %v262
    %v264 = vmul.f32 %v253, %v263
    %v265 = vmul.f32 %v255, %v263
    %v266 = vmul.f32 %v264, %v45
    %v267 = vmul.f32 %v265, %v46
    %v268 = vadd.f32 %v266, %v267
    %v269 = vrot.slane %v268, 4
    %v270 = vadd.f32 %v268, %v269
    %v271 = vrot.slane %v270, 2
    %v272 = vadd.f32 %v270, %v271
    %v273 = vrot.slane %v272, 1
    %v274 = vadd.f32 %v272, %v273
    %v275 = vmax.f32 %v204, %v206
    %v276 = vrot.slane %v275, 4
    %v277 = vmax.f32 %v275, %v276
    %v278 = vrot.slane %v277, 2
    %v279 = vmax.f32 %v277, %v278
    %v280 = vrot.slane %v279, 1
    %v281 = vmax.f32 %v279, %v280
    %v282 = vsub.f32 %v204, %v281
    %v283 = vsub.f32 %v206, %v281
    %v284 = vmul.f32 %v282, 1.442695
    %v285 = vpow.pop %v284
    %v286 = vmul.f32 %v283, 1.442695
    %v287 = vpow.pop %v286
    %v288 = vadd.f32 %v285, %v287
    %v289 = vrot.slane %v288, 4
    %v290 = vadd.f32 %v288, %v289
    %v291 = vrot.slane %v290, 2
    %v292 = vadd.f32 %v290, %v291
    %v293 = vrot.slane %v292, 1
    %v294 = vadd.f32 %v292, %v293
    %v295 = vrcp.pop %v294
    %v296 = vmul.f32 %v285, %v295
    %v297 = vmul.f32 %v287, %v295
    %v298 = vmul.f32 %v296, %v47
    %v299 = vmul.f32 %v297, %v48
    %v300 = vadd.f32 %v298, %v299
    %v301 = vrot.slane %v300, 4
    %v302 = vadd.f32 %v300, %v301
    %v303 = vrot.slane %v302, 2
    %v304 = vadd.f32 %v302, %v303
    %v305 = vrot.slane %v304, 1
    %v306 = vadd.f32 %v304, %v305
    %v307 = vmax.f32 %v208, %v210
    %v308 = vrot.slane %v307, 4
    %v309 = vmax.f32 %v307, %v308
    %v310 = vrot.slane %v309, 2
    %v311 = vmax.f32 %v309, %v310
    %v312 = vrot.slane %v311, 1
    %v313 = vmax.f32 %v311, %v312
    %v314 = vsub.f32 %v208, %v313
    %v315 = vsub.f32 %v210, %v313
    %v316 = vmul.f32 %v314, 1.442695
    %v317 = vpow.pop %v316
    %v318 = vmul.f32 %v315, 1.442695
    %v319 = vpow.pop %v318
    %v320 = vadd.f32 %v317, %v319
    %v321 = vrot.slane %v320, 4
    %v322 = vadd.f32 %v320, %v321
    %v323 = vrot.slane %v322, 2
    %v324 = vadd.f32 %v322, %v323
    %v325 = vrot.slane %v324, 1
    %v326 = vadd.f32 %v324, %v325
    %v327 = vrcp.pop %v326
    %v328 = vmul.f32 %v317, %v327
    %v329 = vmul.f32 %v319, %v327
    %v330 = vmul.f32 %v328, %v49
    %v331 = vmul.f32 %v329, %v50
    %v332 = vadd.f32 %v330, %v331
    %v333 = vrot.slane %v332, 4
    %v334 = vadd.f32 %v332, %v333
    %v335 = vrot.slane %v334, 2
    %v336 = vadd.f32 %v334, %v335
    %v337 = vrot.slane %v336, 1
    %v338 = vadd.f32 %v336, %v337
    %vm339 = vcmask 1040384
    %v340 = vsel %vm339, %v242, %v274
    %vm341 = vcmask 1041408
    %v342 = vsel %vm341, %v340, %v306
    %vm343 = vcmask 1042432
    %v344 = vsel %vm343, %v342, %v338
    %345 = vst [vmem:[#allocation7] sm:$0xf] %v344
    // Predicated region
    $region22: #{tpu_custom_call.1} parent=1 // pred_check
      _
    $region23: #{tpu_custom_call.1} parent=1 // pred_check_branch
      %347 = sbr.rel (0) target = $region25
    $region24: #{tpu_custom_call.1} parent=1 // pred_region
      %s349 = ssub.s32 64, 64
      %350 = vsyncadd [#allocation4], %s349
      %s352 = sshll.u32 [#allocation7], 4
      %s353 = int_to_ptr.vmem [resolvable:$true] %s352
      %355 = dma.vmem_to_hbm [thread:$0]  %s353, 64, %s3, [#allocation4]
    $region25: #{tpu_custom_call.1} parent=1 // pred_fallthru
      _
    // Predicated region
    $region26: #{tpu_custom_call.1} parent=1 // pred_check
      _
    $region27: #{tpu_custom_call.1} parent=1 // pred_check_branch
      %357 = sbr.rel (0) target = $region29
    $region28: #{tpu_custom_call.1} parent=1 // pred_region
      %358 = dma.done [#allocation4], 64
    $region29: #{tpu_custom_call.1} parent=1 // pred_fallthru
      _
    %359 = vsyncpa [#allocation3], 1
    %360 = vsyncpa [#allocation6], 1
    %361 = vsyncpa [#allocation4], 1

</llo_original>
